<compile_context>
chip_gen: v7x
topology: tpu7x:2x2x1
jax: 0.10.0
libtpu: 0.0.40
codegen_flags: <defaults>
</compile_context>

<pallas_src>
from functools import partial

import jax
import jax.numpy as jnp
from jax import lax
from jax.experimental import pallas as pl
from jax.experimental.pallas import tpu as pltpu


_CHUNK = 256  # rows per in-kernel sub-step (bounds live f32 intermediates)


def _round_up(x, m):
    return ((x + m - 1) // m) * m


def _pick_tile(n_rows, requested):
    """Batch tile: big (amortize ~0.35us/step), mult of 8, >=2 grid steps."""
    t = _round_up(max(8, requested), 8)
    t = min(t, _round_up(n_rows, 8))                           # don't exceed batch
    t = min(t, max(8, _round_up(pl.cdiv(n_rows, 2), 8)))       # >=2 steps (v7x 2 TCs)
    if t > _CHUNK:
        t = _round_up(t, _CHUNK)                               # divisible by chunk
    return t


def decoder_kernel(z_ref, w1_ref, b1_ref, w2_ref, b2_ref, w3_ref, b3_ref,
                   o_ref, *, chunk):
    # Weights/biases are tiny (~100 KB) and VMEM-resident across grid steps.
    w1 = w1_ref[...]
    b1 = b1_ref[...]
    w2 = w2_ref[...]
    b2 = b2_ref[...]
    w3 = w3_ref[...]
    b3 = b3_ref[...]

    n_chunks = z_ref.shape[0] // chunk

    def body(c, carry):
        r = pl.multiple_of(c * chunk, chunk)
        z = z_ref[pl.ds(r, chunk), :]                              # [chunk, 131]
        # Layer 1: bf16 (or f32) matmul on MXU, f32 accumulate + bias + ReLU.
        h1 = jnp.dot(z, w1, preferred_element_type=jnp.float32) + b1
        h1 = jnp.maximum(h1, 0.0).astype(w2.dtype)                 # [chunk, 128]
        # Layer 2
        h2 = jnp.dot(h1, w2, preferred_element_type=jnp.float32) + b2
        h2 = jnp.maximum(h2, 0.0).astype(w3.dtype)                 # [chunk, 64]
        # Layer 3 (no activation)
        out = jnp.dot(h2, w3, preferred_element_type=jnp.float32) + b3
        o_ref[pl.ds(r, chunk), :] = out.astype(o_ref.dtype)        # [chunk, 2]
        return carry

    lax.fori_loop(0, n_chunks, body, 0, unroll=True)


def decoder_forward(z, params, *, tile_n=512, compute_dtype=jnp.bfloat16):
    w1, b1, w2, b2, w3, b3 = params
    N, D_in = z.shape
    D_out = w3.shape[1]

    tile_n = _pick_tile(N, tile_n)
    chunk = min(tile_n, _CHUNK)
    grid = (pl.cdiv(N, tile_n),)

    # Low-precision inputs/weights (halve the dominant z read traffic, fast
    # MXU path); biases and accumulation stay f32.
    zc = z.astype(compute_dtype)
    w1c, w2c, w3c = (w.astype(compute_dtype) for w in (w1, w2, w3))
    b1c, b2c, b3c = (b.astype(jnp.float32) for b in (b1, b2, b3))

    kernel = partial(decoder_kernel, chunk=chunk)

    return pl.pallas_call(
        kernel,
        out_shape=jax.ShapeDtypeStruct((N, D_out), z.dtype),
        grid_spec=pl.GridSpec(
            grid=grid,
            in_specs=[
                # batch tiled over the grid; feature dim is the full array
                pl.BlockSpec((tile_n, D_in), lambda i: (i, 0)),
                # weights / biases: same full block every step -> stays resident
                pl.BlockSpec(w1c.shape, lambda i: (0, 0)),
                pl.BlockSpec(b1c.shape, lambda i: (0, 0)),
                pl.BlockSpec(w2c.shape, lambda i: (0, 0)),
                pl.BlockSpec(b2c.shape, lambda i: (0, 0)),
                pl.BlockSpec(w3c.shape, lambda i: (0, 0)),
                pl.BlockSpec(b3c.shape, lambda i: (0, 0)),
            ],
            out_specs=pl.BlockSpec((tile_n, D_out), lambda i: (i, 0)),
        ),
        compiler_params=pltpu.CompilerParams(
            dimension_semantics=("parallel",)),
    )(zc, w1c, b1c, w2c, b2c, w3c, b3c)


def init_params(key, latent_dim=128, dtype=jnp.float32):
    # torch.nn.Linear default init: U(-1/sqrt(fan_in), +1/sqrt(fan_in)).
    dims = [(latent_dim + 3, 128), (128, 64), (64, 2)]
    params = []
    for fan_in, fan_out in dims:
        key, kw, kb = jax.random.split(key, 3)
        bound = 1.0 / jnp.sqrt(fan_in)
        w = jax.random.uniform(kw, (fan_in, fan_out), dtype, -bound, bound)
        b = jax.random.uniform(kb, (1, fan_out), dtype, -bound, bound)
        params += [w, b]
    return tuple(params)


def decoder_reference(z, params):
    w1, b1, w2, b2, w3, b3 = params
    h = jnp.maximum(z @ w1 + b1, 0.0)
    h = jnp.maximum(h @ w2 + b2, 0.0)
    return h @ w3 + b3


if __name__ == "__main__":
    latent_dim = 128
    N = 64                                    # small batch of points
    key = jax.random.PRNGKey(0)
    kz, kp = jax.random.split(key)

    z = jax.random.normal(kz, (N, latent_dim + 3), jnp.float32)   # [64, 131]
    params = init_params(kp, latent_dim=latent_dim)

    # Primary (perf) path: bf16 inputs/weights, f32 accumulation.
    out_bf16 = jax.block_until_ready(decoder_forward(z, params))
    # Full-f32 path for a tight numeric check against the reference.
    out_f32 = jax.block_until_ready(
        decoder_forward(z, params, compute_dtype=jnp.float32))

    ref = decoder_reference(z, params)
    assert out_bf16.shape == (N, 2), out_bf16.shape
    assert jnp.allclose(out_f32, ref, atol=1e-5, rtol=1e-5), "f32 mismatch vs reference"
    assert jnp.allclose(out_bf16, ref, atol=5e-2, rtol=5e-2), "bf16 mismatch vs reference"

    print("KERNEL_OK")
</pallas_src>

<mosaic_0001>
module attributes {stable_mosaic.version = 11 : i64} {
  func.func @decoder_kernel(%arg0: i32, %arg1: memref<32x131xbf16, #tpu.memory_space<vmem>>, %arg2: memref<131x128xbf16, #tpu.memory_space<vmem>>, %arg3: memref<1x128xf32, #tpu.memory_space<vmem>>, %arg4: memref<128x64xbf16, #tpu.memory_space<vmem>>, %arg5: memref<1x64xf32, #tpu.memory_space<vmem>>, %arg6: memref<64x2xbf16, #tpu.memory_space<vmem>>, %arg7: memref<1x2xf32, #tpu.memory_space<vmem>>, %arg8: memref<32x2xf32, #tpu.memory_space<vmem>>) attributes {dimension_semantics = [#tpu.dimension_semantics<parallel>], iteration_bounds = array<i64: 2>, scalar_prefetch = 0 : i64, scratch_operands = 0 : i64, tpu.core_type = #tpu.core_type<tc>, window_params = [{transform_indices = @transform_0, window_bounds = array<i64: 32, 131>}, {pipeline_mode = #tpu.pipeline_mode<synchronous>, transform_indices = @transform_1, window_bounds = array<i64: 131, 128>}, {pipeline_mode = #tpu.pipeline_mode<synchronous>, transform_indices = @transform_2, window_bounds = array<i64: 1, 128>}, {pipeline_mode = #tpu.pipeline_mode<synchronous>, transform_indices = @transform_3, window_bounds = array<i64: 128, 64>}, {pipeline_mode = #tpu.pipeline_mode<synchronous>, transform_indices = @transform_4, window_bounds = array<i64: 1, 64>}, {pipeline_mode = #tpu.pipeline_mode<synchronous>, transform_indices = @transform_5, window_bounds = array<i64: 64, 2>}, {pipeline_mode = #tpu.pipeline_mode<synchronous>, transform_indices = @transform_6, window_bounds = array<i64: 1, 2>}, {transform_indices = @transform_7, window_bounds = array<i64: 32, 2>}]} {
    %c0 = arith.constant 0 : index
    %c0_0 = arith.constant 0 : index
    %0 = vector.load %arg2[%c0, %c0_0] : memref<131x128xbf16, #tpu.memory_space<vmem>>, vector<131x128xbf16>
    %c0_1 = arith.constant 0 : index
    %c0_2 = arith.constant 0 : index
    %1 = vector.load %arg3[%c0_1, %c0_2] : memref<1x128xf32, #tpu.memory_space<vmem>>, vector<1x128xf32>
    %c0_3 = arith.constant 0 : index
    %c0_4 = arith.constant 0 : index
    %2 = vector.load %arg4[%c0_3, %c0_4] : memref<128x64xbf16, #tpu.memory_space<vmem>>, vector<128x64xbf16>
    %c0_5 = arith.constant 0 : index
    %c0_6 = arith.constant 0 : index
    %3 = vector.load %arg5[%c0_5, %c0_6] : memref<1x64xf32, #tpu.memory_space<vmem>>, vector<1x64xf32>
    %c0_7 = arith.constant 0 : index
    %c0_8 = arith.constant 0 : index
    %4 = vector.load %arg6[%c0_7, %c0_8] : memref<64x2xbf16, #tpu.memory_space<vmem>>, vector<64x2xbf16>
    %c0_9 = arith.constant 0 : index
    %c0_10 = arith.constant 0 : index
    %5 = vector.load %arg7[%c0_9, %c0_10] : memref<1x2xf32, #tpu.memory_space<vmem>>, vector<1x2xf32>
    %c0_i32 = arith.constant 0 : i32
    %c32_i32 = arith.constant 32 : i32
    %6 = arith.muli %c0_i32, %c32_i32 : i32
    %7 = tpu.assume_multiple %6, 32 : i32
    %8 = arith.index_cast %7 : i32 to index
    %c0_11 = arith.constant 0 : index
    %9 = vector.load %arg1[%8, %c0_11] : memref<32x131xbf16, #tpu.memory_space<vmem>>, vector<32x131xbf16>
    %cst = arith.constant dense<0.000000e+00> : vector<32x128xf32>
    %10 = tpu.matmul %9, %0, %cst {dimension_numbers = #tpu.dot_dimension_numbers<[1], [0], [0], [1], [0, 0, 1, 1], [], []>} : vector<32x131xbf16>, vector<131x128xbf16>, vector<32x128xf32> -> vector<32x128xf32>
    %11 = vector.broadcast %1 : vector<1x128xf32> to vector<32x128xf32>
    %12 = arith.addf %10, %11 : vector<32x128xf32>
    %cst_12 = arith.constant 0.000000e+00 : f32
    %13 = vector.broadcast %cst_12 : f32 to vector<32x128xf32>
    %14 = arith.maximumf %12, %13 : vector<32x128xf32>
    %15 = arith.truncf %14 : vector<32x128xf32> to vector<32x128xbf16>
    %cst_13 = arith.constant dense<0.000000e+00> : vector<32x64xf32>
    %16 = tpu.matmul %15, %2, %cst_13 {dimension_numbers = #tpu.dot_dimension_numbers<[1], [0], [0], [1], [0, 0, 1, 1], [], []>} : vector<32x128xbf16>, vector<128x64xbf16>, vector<32x64xf32> -> vector<32x64xf32>
    %17 = vector.broadcast %3 : vector<1x64xf32> to vector<32x64xf32>
    %18 = arith.addf %16, %17 : vector<32x64xf32>
    %cst_14 = arith.constant 0.000000e+00 : f32
    %19 = vector.broadcast %cst_14 : f32 to vector<32x64xf32>
    %20 = arith.maximumf %18, %19 : vector<32x64xf32>
    %21 = arith.truncf %20 : vector<32x64xf32> to vector<32x64xbf16>
    %cst_15 = arith.constant dense<0.000000e+00> : vector<32x2xf32>
    %22 = tpu.matmul %21, %4, %cst_15 {dimension_numbers = #tpu.dot_dimension_numbers<[1], [0], [0], [1], [0, 0, 1, 1], [], []>} : vector<32x64xbf16>, vector<64x2xbf16>, vector<32x2xf32> -> vector<32x2xf32>
    %23 = vector.broadcast %5 : vector<1x2xf32> to vector<32x2xf32>
    %24 = arith.addf %22, %23 : vector<32x2xf32>
    %25 = arith.index_cast %7 : i32 to index
    %c0_16 = arith.constant 0 : index
    %26 = vector.load %arg8[%25, %c0_16] : memref<32x2xf32, #tpu.memory_space<vmem>>, vector<32x2xf32>
    tpu.vector_store %arg8[%25, %c0_16], %24 {strides = array<i32>} : memref<32x2xf32, #tpu.memory_space<vmem>>, vector<32x2xf32>,
    %c1_i32 = arith.constant 1 : i32
    return
  }
  func.func @transform_0(%arg0: i32) -> (i32, i32) {
    %c0_i32 = arith.constant 0 : i32
    %c0_i32_0 = arith.constant 0 : i32
    return %arg0, %c0_i32 : i32, i32
  }
  func.func @transform_1(%arg0: i32) -> (i32, i32) {
    %c0_i32 = arith.constant 0 : i32
    %c0_i32_0 = arith.constant 0 : i32
    %c0_i32_1 = arith.constant 0 : i32
    return %c0_i32, %c0_i32_0 : i32, i32
  }
  func.func @transform_2(%arg0: i32) -> (i32, i32) {
    %c0_i32 = arith.constant 0 : i32
    %c0_i32_0 = arith.constant 0 : i32
    %c0_i32_1 = arith.constant 0 : i32
    return %c0_i32, %c0_i32_0 : i32, i32
  }
  func.func @transform_3(%arg0: i32) -> (i32, i32) {
    %c0_i32 = arith.constant 0 : i32
    %c0_i32_0 = arith.constant 0 : i32
    %c0_i32_1 = arith.constant 0 : i32
    return %c0_i32, %c0_i32_0 : i32, i32
  }
  func.func @transform_4(%arg0: i32) -> (i32, i32) {
    %c0_i32 = arith.constant 0 : i32
    %c0_i32_0 = arith.constant 0 : i32
    %c0_i32_1 = arith.constant 0 : i32
    return %c0_i32, %c0_i32_0 : i32, i32
  }
  func.func @transform_5(%arg0: i32) -> (i32, i32) {
    %c0_i32 = arith.constant 0 : i32
    %c0_i32_0 = arith.constant 0 : i32
    %c0_i32_1 = arith.constant 0 : i32
    return %c0_i32, %c0_i32_0 : i32, i32
  }
  func.func @transform_6(%arg0: i32) -> (i32, i32) {
    %c0_i32 = arith.constant 0 : i32
    %c0_i32_0 = arith.constant 0 : i32
    %c0_i32_1 = arith.constant 0 : i32
    return %c0_i32, %c0_i32_0 : i32, i32
  }
  func.func @transform_7(%arg0: i32) -> (i32, i32) {
    %c0_i32 = arith.constant 0 : i32
    %c0_i32_0 = arith.constant 0 : i32
    return %arg0, %c0_i32 : i32, i32
  }
}

</mosaic_0001>

<llo_original>
// kernel: tpu_custom_call.1
$region0: #{tpu_custom_call.1}
  #allocation0 [shape = 'u32[]', space=smem, size = 0x4, offset = 0x4, fixed_abs, tag = 'smem constant byte address 0x4 - core index']
  #allocation1 [shape = 'u32[144,128]{1,0:T(1,128)}', space=vmem, size = 0x12000, scoped, tag = 'internal scratch']
  %s0 = inlined_call_operand.vmem [shape: bf16[64,131], index: 0, kind: input, shape index: {}]
  %s1 = inlined_call_operand.vmem [shape: bf16[131,128], index: 1, kind: input, shape index: {}]
  %s2 = inlined_call_operand.vmem [shape: f32[1,128], index: 2, kind: input, shape index: {}]
  %s3 = inlined_call_operand.vmem [shape: bf16[128,64], index: 3, kind: input, shape index: {}]
  %s4 = inlined_call_operand.vmem [shape: f32[1,64], index: 4, kind: input, shape index: {}]
  %s5 = inlined_call_operand.vmem [shape: bf16[64,2], index: 5, kind: input, shape index: {}]
  %s6 = inlined_call_operand.vmem [shape: f32[1,2], index: 6, kind: input, shape index: {}]
  %s7 = inlined_call_operand.vmem [shape: f32[64,2], index: 7, kind: output, shape index: {}]
  %s8 = sld [smem:[#allocation0]]
  $region61: #{tpu_custom_call.1} parent=0
    _
  %s10 = ssub.s32 1, %s8
  %s11 = scalar_select 0, %s10, %s8
  loop: start=0, step=1, limit=4
  $region2: #{tpu_custom_call.1} parent=0 // loop_pre_header
    _
  $region3: #{tpu_custom_call.1} parent=0 // loop_header
    %s13 = sphi 0, %s17
    %p14 = scmp.ge.s32.totalorder %s13, 4
    %s23 = sphi 0, %s25
    %s26 = sphi 0, %s23
    %s27 = sphi 0, %s26
    %s43 = sphi 0, %s27
    %s47 = sphi 0, %s47
    %s49 = sphi 0, %s47
    %s50 = sphi 0, %s49
    %s64 = sphi 0, %s50
    %s68 = sphi 0, %s68
    %s70 = sphi 0, %s68
    %s71 = sphi 0, %s70
    %s85 = sphi 0, %s71
    %s89 = sphi 0, %s89
    %s91 = sphi 0, %s89
    %s92 = sphi 0, %s91
    %s106 = sphi 0, %s92
    %s110 = sphi 0, %s110
    %s112 = sphi 0, %s110
    %s113 = sphi 0, %s112
    %s127 = sphi 0, %s113
    %s131 = sphi 0, %s131
    %s133 = sphi 0, %s131
    %s134 = sphi 0, %s133
    %s148 = sphi 0, %s134
    %s152 = sphi 0, %s152
    %s154 = sphi 0, %s152
    %s155 = sphi 0, %s154
    %s169 = sphi 0, %s155
    %s175 = sphi 0, %s177
    %s178 = sphi 0, %s175
    %s179 = sphi 0, %s178
    %s195 = sphi 0, %s179
  $region4: #{tpu_custom_call.1} parent=0 // loop_header_branch
    %16 = sbr.rel (%p14) target = $region8
  $region5: #{tpu_custom_call.1} parent=0 // loop_body
    %s18 = ssub.s32 %s13, 1
    %s19 = ssub.s32 %s13, 2
    %s20 = sadd.s32 %s13, 1
    %s21 = ssub.s32 %s13, %s20
    %p22 = scmp.eq.s32.totalorder %s21, 0
    %s24 = sadd.s32 %s23, 1
    %s25 = scalar_select %p22, %s23, %s24
    %p28 = pneg %p22
    %p29 = scmp.eq.s32.totalorder %s13, 1
    %p30 = por %p28, %p29
    %p31 = scmp.ne.s32.totalorder %s23, %s26
    %p32 = scmp.eq.s32.totalorder %s13, 0
    %p33 = por %p31, %p32
    %p34 = scmp.ne.s32.totalorder %s23, %s26
    %p35 = scmp.eq.s32.totalorder %s18, 1
    %p36 = por %p34, %p35
    %p37 = scmp.ne.s32.totalorder %s26, %s27
    %p38 = scmp.eq.s32.totalorder %s18, 0
    %p39 = por %p37, %p38
    %p40 = scmp.ne.s32.totalorder %s26, %s27
    %p41 = scmp.eq.s32.totalorder %s19, 1
    %p42 = por %p40, %p41
    %p44 = scmp.ne.s32.totalorder %s27, %s43
    %p45 = scmp.eq.s32.totalorder %s19, 0
    %p46 = por %p44, %p45
    %s48 = sadd.s32 %s47, 1
    %p51 = scmp.eq.s32.totalorder %s13, 1
    %p52 = scmp.ne.s32.totalorder %s47, %s49
    %p53 = scmp.eq.s32.totalorder %s13, 0
    %p54 = por %p52, %p53
    %p55 = scmp.ne.s32.totalorder %s47, %s49
    %p56 = scmp.eq.s32.totalorder %s18, 1
    %p57 = por %p55, %p56
    %p58 = scmp.ne.s32.totalorder %s49, %s50
    %p59 = scmp.eq.s32.totalorder %s18, 0
    %p60 = por %p58, %p59
    %p61 = scmp.ne.s32.totalorder %s49, %s50
    %p62 = scmp.eq.s32.totalorder %s19, 1
    %p63 = por %p61, %p62
    %p65 = scmp.ne.s32.totalorder %s50, %s64
    %p66 = scmp.eq.s32.totalorder %s19, 0
    %p67 = por %p65, %p66
    %s69 = sadd.s32 %s68, 1
    %p72 = scmp.eq.s32.totalorder %s13, 1
    %p73 = scmp.ne.s32.totalorder %s68, %s70
    %p74 = scmp.eq.s32.totalorder %s13, 0
    %p75 = por %p73, %p74
    %p76 = scmp.ne.s32.totalorder %s68, %s70
    %p77 = scmp.eq.s32.totalorder %s18, 1
    %p78 = por %p76, %p77
    %p79 = scmp.ne.s32.totalorder %s70, %s71
    %p80 = scmp.eq.s32.totalorder %s18, 0
    %p81 = por %p79, %p80
    %p82 = scmp.ne.s32.totalorder %s70, %s71
    %p83 = scmp.eq.s32.totalorder %s19, 1
    %p84 = por %p82, %p83
    %p86 = scmp.ne.s32.totalorder %s71, %s85
    %p87 = scmp.eq.s32.totalorder %s19, 0
    %p88 = por %p86, %p87
    %s90 = sadd.s32 %s89, 1
    %p93 = scmp.eq.s32.totalorder %s13, 1
    %p94 = scmp.ne.s32.totalorder %s89, %s91
    %p95 = scmp.eq.s32.totalorder %s13, 0
    %p96 = por %p94, %p95
    %p97 = scmp.ne.s32.totalorder %s89, %s91
    %p98 = scmp.eq.s32.totalorder %s18, 1
    %p99 = por %p97, %p98
    %p100 = scmp.ne.s32.totalorder %s91, %s92
    %p101 = scmp.eq.s32.totalorder %s18, 0
    %p102 = por %p100, %p101
    %p103 = scmp.ne.s32.totalorder %s91, %s92
    %p104 = scmp.eq.s32.totalorder %s19, 1
    %p105 = por %p103, %p104
    %p107 = scmp.ne.s32.totalorder %s92, %s106
    %p108 = scmp.eq.s32.totalorder %s19, 0
    %p109 = por %p107, %p108
    %s111 = sadd.s32 %s110, 1
    %p114 = scmp.eq.s32.totalorder %s13, 1
    %p115 = scmp.ne.s32.totalorder %s110, %s112
    %p116 = scmp.eq.s32.totalorder %s13, 0
    %p117 = por %p115, %p116
    %p118 = scmp.ne.s32.totalorder %s110, %s112
    %p119 = scmp.eq.s32.totalorder %s18, 1
    %p120 = por %p118, %p119
    %p121 = scmp.ne.s32.totalorder %s112, %s113
    %p122 = scmp.eq.s32.totalorder %s18, 0
    %p123 = por %p121, %p122
    %p124 = scmp.ne.s32.totalorder %s112, %s113
    %p125 = scmp.eq.s32.totalorder %s19, 1
    %p126 = por %p124, %p125
    %p128 = scmp.ne.s32.totalorder %s113, %s127
    %p129 = scmp.eq.s32.totalorder %s19, 0
    %p130 = por %p128, %p129
    %s132 = sadd.s32 %s131, 1
    %p135 = scmp.eq.s32.totalorder %s13, 1
    %p136 = scmp.ne.s32.totalorder %s131, %s133
    %p137 = scmp.eq.s32.totalorder %s13, 0
    %p138 = por %p136, %p137
    %p139 = scmp.ne.s32.totalorder %s131, %s133
    %p140 = scmp.eq.s32.totalorder %s18, 1
    %p141 = por %p139, %p140
    %p142 = scmp.ne.s32.totalorder %s133, %s134
    %p143 = scmp.eq.s32.totalorder %s18, 0
    %p144 = por %p142, %p143
    %p145 = scmp.ne.s32.totalorder %s133, %s134
    %p146 = scmp.eq.s32.totalorder %s19, 1
    %p147 = por %p145, %p146
    %p149 = scmp.ne.s32.totalorder %s134, %s148
    %p150 = scmp.eq.s32.totalorder %s19, 0
    %p151 = por %p149, %p150
    %s153 = sadd.s32 %s152, 1
    %p156 = scmp.eq.s32.totalorder %s13, 1
    %p157 = scmp.ne.s32.totalorder %s152, %s154
    %p158 = scmp.eq.s32.totalorder %s13, 0
    %p159 = por %p157, %p158
    %p160 = scmp.ne.s32.totalorder %s152, %s154
    %p161 = scmp.eq.s32.totalorder %s18, 1
    %p162 = por %p160, %p161
    %p163 = scmp.ne.s32.totalorder %s154, %s155
    %p164 = scmp.eq.s32.totalorder %s18, 0
    %p165 = por %p163, %p164
    %p166 = scmp.ne.s32.totalorder %s154, %s155
    %p167 = scmp.eq.s32.totalorder %s19, 1
    %p168 = por %p166, %p167
    %p170 = scmp.ne.s32.totalorder %s155, %s169
    %p171 = scmp.eq.s32.totalorder %s19, 0
    %p172 = por %p170, %p171
    %s173 = ssub.s32 %s13, %s20
    %p174 = scmp.eq.s32.totalorder %s173, 0
    %s176 = sadd.s32 %s175, 1
    %s177 = scalar_select %p174, %s175, %s176
    %p180 = pneg %p174
    %p181 = scmp.eq.s32.totalorder %s13, 1
    %p182 = por %p180, %p181
    %p183 = scmp.ne.s32.totalorder %s175, %s178
    %p184 = scmp.eq.s32.totalorder %s13, 0
    %p185 = por %p183, %p184
    %p186 = scmp.ne.s32.totalorder %s175, %s178
    %p187 = scmp.eq.s32.totalorder %s18, 1
    %p188 = por %p186, %p187
    %p189 = scmp.ne.s32.totalorder %s178, %s179
    %p190 = scmp.eq.s32.totalorder %s18, 0
    %p191 = por %p189, %p190
    %p192 = scmp.ne.s32.totalorder %s178, %s179
    %p193 = scmp.eq.s32.totalorder %s19, 1
    %p194 = por %p192, %p193
    %p196 = scmp.ne.s32.totalorder %s179, %s195
    %p197 = scmp.eq.s32.totalorder %s19, 0
    %p198 = por %p196, %p197
    %p199 = scmp.le.s32.totalorder 1, %s13
    %p200 = scmp.lt.s32.totalorder %s13, 3
    %p201 = pnand %p199, %p200
    %p202 = pneg %p201
    // Predicated region
    $region9: #{tpu_custom_call.1} parent=5 // pred_check
      _
    $region10: #{tpu_custom_call.1} parent=5 // pred_check_branch
      %204 = sbr.rel (%p201) target = $region12
    $region11: #{tpu_custom_call.1} parent=5 // pred_region
      %s205 = ssub.s32 %s13, 1
      // Predicated region
      $region13: #{tpu_custom_call.1} parent=11 // pred_check
        %p206 = pneg %p60
      $region14: #{tpu_custom_call.1} parent=11 // pred_check_branch
        %208 = sbr.rel (%p206) target = $region16
      $region15: #{tpu_custom_call.1} parent=11 // pred_region
        _
      $region16: #{tpu_custom_call.1} parent=11 // pred_fallthru
        _
      // Predicated region
      $region17: #{tpu_custom_call.1} parent=11 // pred_check
        %p209 = pneg %p81
      $region18: #{tpu_custom_call.1} parent=11 // pred_check_branch
        %211 = sbr.rel (%p209) target = $region20
      $region19: #{tpu_custom_call.1} parent=11 // pred_region
        _
      $region20: #{tpu_custom_call.1} parent=11 // pred_fallthru
        _
      // Predicated region
      $region21: #{tpu_custom_call.1} parent=11 // pred_check
        %p212 = pneg %p102
      $region22: #{tpu_custom_call.1} parent=11 // pred_check_branch
        %214 = sbr.rel (%p212) target = $region24
      $region23: #{tpu_custom_call.1} parent=11 // pred_region
        _
      $region24: #{tpu_custom_call.1} parent=11 // pred_fallthru
        _
      // Predicated region
      $region25: #{tpu_custom_call.1} parent=11 // pred_check
        %p215 = pneg %p123
      $region26: #{tpu_custom_call.1} parent=11 // pred_check_branch
        %217 = sbr.rel (%p215) target = $region28
      $region27: #{tpu_custom_call.1} parent=11 // pred_region
        _
      $region28: #{tpu_custom_call.1} parent=11 // pred_fallthru
        _
      // Predicated region
      $region29: #{tpu_custom_call.1} parent=11 // pred_check
        %p218 = pneg %p144
      $region30: #{tpu_custom_call.1} parent=11 // pred_check_branch
        %220 = sbr.rel (%p218) target = $region32
      $region31: #{tpu_custom_call.1} parent=11 // pred_region
        _
      $region32: #{tpu_custom_call.1} parent=11 // pred_fallthru
        _
      // Predicated region
      $region33: #{tpu_custom_call.1} parent=11 // pred_check
        %p221 = pneg %p165
      $region34: #{tpu_custom_call.1} parent=11 // pred_check_branch
        %223 = sbr.rel (%p221) target = $region36
      $region35: #{tpu_custom_call.1} parent=11 // pred_region
        _
      $region36: #{tpu_custom_call.1} parent=11 // pred_fallthru
        _
    $region12: #{tpu_custom_call.1} parent=5 // pred_fallthru
      _
    %p224 = scmp.lt.s32.totalorder %s13, 2
    // Predicated region
    $region37: #{tpu_custom_call.1} parent=5 // pred_check
      %p225 = pneg %p224
    $region38: #{tpu_custom_call.1} parent=5 // pred_check_branch
      %227 = sbr.rel (%p225) target = $region40
    $region39: #{tpu_custom_call.1} parent=5 // pred_region
      // Predicated region
      $region41: #{tpu_custom_call.1} parent=39 // pred_check
        %p228 = pneg %p33
      $region42: #{tpu_custom_call.1} parent=39 // pred_check_branch
        %230 = sbr.rel (%p228) target = $region44
      $region43: #{tpu_custom_call.1} parent=39 // pred_region
        %s231 = smul.u32 4, %s13
        %p232 = scmp.lt.s32.totalorder %s231, 7
        %s233 = scalar_select %p232, %s231, 7
        %s234 = smul.addr %s233, 2
        %s235 = smul.addr %s234, 4
        %s236 = scalar_lea.vmem %s0, %s235
        %s237 = smul.u32 4, %s13
      $region44: #{tpu_custom_call.1} parent=39 // pred_fallthru
        _
    $region40: #{tpu_custom_call.1} parent=5 // pred_fallthru
      _
    %p238 = scmp.le.s32.totalorder 1, %s13
    %p239 = scmp.lt.s32.totalorder %s13, 3
    %p240 = pnand %p238, %p239
    %p241 = pneg %p240
    // Predicated region
    $region45: #{tpu_custom_call.1} parent=5 // pred_check
      _
    $region46: #{tpu_custom_call.1} parent=5 // pred_check_branch
      %243 = sbr.rel (%p240) target = $region48
    $region47: #{tpu_custom_call.1} parent=5 // pred_region
      %s244 = ssub.s32 %s13, 1
      %s245 = smul.u32 4, %s18
      %p246 = scmp.lt.s32.totalorder %s245, 7
      %s247 = scalar_select %p246, %s245, 7
      %s248 = smul.addr %s247, 2
      %s249 = smul.addr %s248, 4
      %s250 = scalar_lea.vmem %s0, %s249
      %p251 = pneg %p39
      %p252 = pneg %p36
      %p253 = pneg %p60
      %p254 = pneg %p57
      %p255 = pneg %p81
      %p256 = pneg %p78
      %p257 = pneg %p102
      %p258 = pneg %p99
      %p259 = pneg %p123
      %p260 = pneg %p120
      %p261 = pneg %p144
      %p262 = pneg %p141
      %p263 = pneg %p165
      %p264 = pneg %p162
      %p265 = pneg %p191
      %p266 = pneg %p188
      %s267 = smul.u32 4, %s18
      %p268 = scmp.lt.s32.totalorder %s267, 7
      %s269 = scalar_select %p268, %s267, 7
      %s270 = smul.addr %s269, 8
      %s271 = scalar_lea.vmem %s7, %s270
      %s272 = smul.u32 4, %s18
      %p273 = scmp.lt.s32.totalorder %s272, 7
      %s274 = scalar_select %p273, %s272, 7
      %s275 = smul.addr %s274, 2
      %s276 = smul.addr %s275, 4
      %s277 = scalar_lea.vmem %s0, %s276
      %s278 = smul.u32 4, %s18
      %s279 = smul.u32 4, %s18
      %p280 = scmp.lt.s32.totalorder %s279, 7
      %s281 = scalar_select %p280, %s279, 7
      %s282 = smul.addr %s281, 8
      %s283 = scalar_lea.vmem %s7, %s282
      %s284 = smul.u32 4, %s18
      %v286 = vld [vmem:[%s1] sm:$0xf]
      %v287 = vld [vmem:[%s1 + $0x4] sm:$0xf]
      %v288 = vld [vmem:[%s1 + $0x8] sm:$0xf]
      %v289 = vld [vmem:[%s1 + $0xc] sm:$0xf]
      %v290 = vld [vmem:[%s1 + $0x10] sm:$0xf]
      %v291 = vld [vmem:[%s1 + $0x14] sm:$0xf]
      %v292 = vld [vmem:[%s1 + $0x18] sm:$0xf]
      %v293 = vld [vmem:[%s1 + $0x1c] sm:$0xf]
      %v294 = vld [vmem:[%s1 + $0x20] sm:$0xf]
      %v295 = vld [vmem:[%s1 + $0x24] sm:$0xf]
      %v296 = vld [vmem:[%s1 + $0x28] sm:$0xf]
      %v297 = vld [vmem:[%s1 + $0x2c] sm:$0xf]
      %v298 = vld [vmem:[%s1 + $0x30] sm:$0xf]
      %v299 = vld [vmem:[%s1 + $0x34] sm:$0xf]
      %v300 = vld [vmem:[%s1 + $0x38] sm:$0xf]
      %v301 = vld [vmem:[%s1 + $0x3c] sm:$0xf]
      %v302 = vld [vmem:[%s1 + $0x40] sm:$0x3]
      %v303 = vld [vmem:[%s2] sm:$0x1]
      %v304 = vld [vmem:[%s3] sm:$0xf]
      %v305 = vld [vmem:[%s3 + $0x4] sm:$0xf]
      %v306 = vld [vmem:[%s3 + $0x8] sm:$0xf]
      %v307 = vld [vmem:[%s3 + $0xc] sm:$0xf]
      %v308 = vld [vmem:[%s3 + $0x10] sm:$0xf]
      %v309 = vld [vmem:[%s3 + $0x14] sm:$0xf]
      %v310 = vld [vmem:[%s3 + $0x18] sm:$0xf]
      %v311 = vld [vmem:[%s3 + $0x1c] sm:$0xf]
      %v312 = vld [vmem:[%s3 + $0x20] sm:$0xf]
      %v313 = vld [vmem:[%s3 + $0x24] sm:$0xf]
      %v314 = vld [vmem:[%s3 + $0x28] sm:$0xf]
      %v315 = vld [vmem:[%s3 + $0x2c] sm:$0xf]
      %v316 = vld [vmem:[%s3 + $0x30] sm:$0xf]
      %v317 = vld [vmem:[%s3 + $0x34] sm:$0xf]
      %v318 = vld [vmem:[%s3 + $0x38] sm:$0xf]
      %v319 = vld [vmem:[%s3 + $0x3c] sm:$0xf]
      %v320 = vld [vmem:[%s4] sm:$0x1]
      %v321 = vld [vmem:[%s5] sm:$0xf]
      %v322 = vld [vmem:[%s5 + $0x4] sm:$0xf]
      %v323 = vld [vmem:[%s5 + $0x8] sm:$0xf]
      %v324 = vld [vmem:[%s5 + $0xc] sm:$0xf]
      %v325 = vld [vmem:[%s5 + $0x10] sm:$0xf]
      %v326 = vld [vmem:[%s5 + $0x14] sm:$0xf]
      %v327 = vld [vmem:[%s5 + $0x18] sm:$0xf]
      %v328 = vld [vmem:[%s5 + $0x1c] sm:$0xf]
      %v329 = vld [vmem:[%s6] sm:$0x1]
      %s330 = smul.u32 0, 2
      %s331 = smul.addr %s330, 4
      %s332 = scalar_lea.vmem %s277, %s331
      %v333 = vld [vmem:[%s332] sm:$0xff]
      %v334 = vld [vmem:[%s332 + $0x8] sm:$0xff]
      %v335 = vld [vmem:[%s332 + $0x10] sm:$0xff]
      %v336 = vld [vmem:[%s332 + $0x18] sm:$0xff]
      %v338 = vlaneseq
      %v339 = vshrl.u32 %v338, 7
      %v340 = vsub.s32 0, %v339
      %v341 = vrot.slane %v303, %v340
      %v347 = vunpack.c.l.b16 %v333
      %v348 = vunpack.c.h.b16 %v333
      %v349 = vunpack.c.l.b16 %v334
      %v350 = vunpack.c.h.b16 %v334
      %v351 = vunpack.c.l.b16 %v335
      %v352 = vunpack.c.h.b16 %v335
      %v353 = vunpack.c.l.b16 %v336
      %v354 = vunpack.c.h.b16 %v336
      %v355 = vpack.c.b16 %v349, %v347
      %v356 = vpack.c.b16 %v350, %v348
      %v357 = vpack.c.b16 %v353, %v351
      %v358 = vpack.c.b16 %v354, %v352
      %v378 = vunpack.c.l.b16 %v286
      %v379 = vunpack.c.l.b16 %v287
      %v380 = vunpack.c.l.b16 %v288
      %v381 = vunpack.c.l.b16 %v289
      %v382 = vunpack.c.l.b16 %v290
      %v383 = vunpack.c.l.b16 %v291
      %v384 = vunpack.c.l.b16 %v292
      %v385 = vunpack.c.l.b16 %v293
      %v386 = vunpack.c.l.b16 %v294
      %v387 = vunpack.c.l.b16 %v295
      %v388 = vunpack.c.l.b16 %v296
      %v389 = vunpack.c.l.b16 %v297
      %v390 = vunpack.c.l.b16 %v298
      %v391 = vunpack.c.l.b16 %v299
      %v392 = vunpack.c.l.b16 %v300
      %v393 = vunpack.c.l.b16 %v301
      %v394 = vunpack.c.l.b16 %v302
      %v395 = vpack.c.b16 %v379, %v378
      %v396 = vpack.c.b16 %v381, %v380
      %v397 = vpack.c.b16 %v383, %v382
      %v398 = vpack.c.b16 %v385, %v384
      %v399 = vpack.c.b16 %v387, %v386
      %v400 = vpack.c.b16 %v389, %v388
      %v401 = vpack.c.b16 %v391, %v390
      %v402 = vpack.c.b16 %v393, %v392
      %v403 = vpack.c.b16 %v394, %v394
      %vm412 = vcmask 23552
      %v414 = vsel %vm412, %v356, 0
      %v417 = vsel %vm412, %v358, 0
      %vm419 = vcmask 1040384
      %vm420 = vcmask 1041408
      %v421 = vsel %vm419, 4294967295, 65535
      %v422 = vsel %vm420, %v421, 0
      %v424 = vand.u32 %v403, %v422
      %426 = vmatprep.subr.bf16.mxu0 0
      %427 = vmatpush1.bf16.msra.mxu0 %v395
      %428 = vmatprep.subr.bf16.mxu0 0
      %429 = vmatpush1.bf16.msra.mxu0 %v396
      %430 = vmatprep.subr.bf16.mxu0 0
      %431 = vmatpush1.bf16.msra.mxu0 %v397
      %432 = vmatprep.subr.bf16.mxu0 0
      %433 = vmatpush1.bf16.msra.mxu0 %v398
      %434 = vmatprep.subr.bf16.mxu0 0
      %435 = vmatpush1.bf16.msra.mxu0 %v399
      %436 = vmatprep.subr.bf16.mxu0 0
      %437 = vmatpush1.bf16.msra.mxu0 %v400
      %438 = vmatprep.subr.bf16.mxu0 0
      %439 = vmatpush1.bf16.msra.mxu0 %v401
      %440 = vmatprep.subr.bf16.mxu0 0
      %441 = vmatpush1.bf16.msra.mxu0 %v402
      %442 = vmatprep.subr.bf16.mxu0 0
      %443 = vmatpush1.bf16.msra.mxu0 %v424
      %444 = vmatprep.subr.bf16.mxu0 0
      %445 = vmatpush1.bf16.msra.mxu0 0
      %446 = vmatprep.subr.bf16.mxu0 0
      %447 = vmatpush1.bf16.msra.mxu0 0
      %448 = vmatprep.subr.bf16.mxu0 0
      %449 = vmatpush1.bf16.msra.mxu0 0
      %450 = vmatprep.subr.bf16.mxu0 0
      %451 = vmatpush1.bf16.msra.mxu0 0
      %452 = vmatprep.subr.bf16.mxu0 0
      %453 = vmatpush1.bf16.msra.mxu0 0
      %454 = vmatprep.subr.bf16.mxu0 0
      %455 = vmatpush1.bf16.msra.mxu0 0
      %456 = vmatprep.subr.bf16.mxu0 0
      %457 = vmatpush1.bf16.msra.mxu0 0
      %458 = vmatprep.mubr.bf16.mxu0 %v414
      %459 = vmatmul.mubr.bf16.gmra.mrb[0].mxu0 %v355
      %v460 = vpop.f32.mrb[0].mxu0
      %v461 = vadd.f32 %v341, %v460
      %v462 = vpop.f32.mrb[0].mxu0
      %v463 = vpop.f32.mrb[0].mxu0
      %v464 = vadd.f32 %v341, %v463
      %v465 = vpop.f32.mrb[0].mxu0
      %466 = vmatprep.mubr.bf16.mxu0 %v417
      %467 = vmatmul.mubr.bf16.gmra.mrb[0].mxu0 %v357
      %v468 = vpop.f32.mrb[0].mxu0
      %v469 = vadd.f32 %v341, %v468
      %v470 = vpop.f32.mrb[0].mxu0
      %v471 = vpop.f32.mrb[0].mxu0
      %v472 = vadd.f32 %v341, %v471
      %v473 = vpop.f32.mrb[0].mxu0
      %474 = vdwg.mxu0
      %v475 = vmax.f32 %v461, 0.0
      %v476 = vmax.f32 %v464, 0.0
      %v477 = vmax.f32 %v469, 0.0
      %v478 = vmax.f32 %v472, 0.0
      %v479 = vpack.c.bf16 %v476, %v475
      %v480 = vpack.c.bf16 %v478, %v477
      %v482 = vlaneseq
      %v483 = vshrl.u32 %v482, 7
      %v484 = vsub.s32 0, %v483
      %v485 = vrot.slane %v320, %v484
      %v503 = vunpack.c.l.b16 %v304
      %v504 = vunpack.c.l.b16 %v305
      %v505 = vunpack.c.l.b16 %v306
      %v506 = vunpack.c.l.b16 %v307
      %v507 = vunpack.c.l.b16 %v308
      %v508 = vunpack.c.l.b16 %v309
      %v509 = vunpack.c.l.b16 %v310
      %v510 = vunpack.c.l.b16 %v311
      %v511 = vunpack.c.l.b16 %v312
      %v512 = vunpack.c.l.b16 %v313
      %v513 = vunpack.c.l.b16 %v314
      %v514 = vunpack.c.l.b16 %v315
      %v515 = vunpack.c.l.b16 %v316
      %v516 = vunpack.c.l.b16 %v317
      %v517 = vunpack.c.l.b16 %v318
      %v518 = vunpack.c.l.b16 %v319
      %v519 = vpack.c.b16 %v504, %v503
      %v520 = vpack.c.b16 %v506, %v505
      %v521 = vpack.c.b16 %v508, %v507
      %v522 = vpack.c.b16 %v510, %v509
      %v523 = vpack.c.b16 %v512, %v511
      %v524 = vpack.c.b16 %v514, %v513
      %v525 = vpack.c.b16 %v516, %v515
      %v526 = vpack.c.b16 %v518, %v517
      %535 = vmatprep.subr.bf16.mxu0 0
      %536 = vmatpush1.bf16.msra.mxu0 %v519
      %537 = vmatprep.subr.bf16.mxu0 0
      %538 = vmatpush1.bf16.msra.mxu0 %v520
      %539 = vmatprep.subr.bf16.mxu0 0
      %540 = vmatpush1.bf16.msra.mxu0 %v521
      %541 = vmatprep.subr.bf16.mxu0 0
      %542 = vmatpush1.bf16.msra.mxu0 %v522
      %543 = vmatprep.subr.bf16.mxu0 0
      %544 = vmatpush1.bf16.msra.mxu0 %v523
      %545 = vmatprep.subr.bf16.mxu0 0
      %546 = vmatpush1.bf16.msra.mxu0 %v524
      %547 = vmatprep.subr.bf16.mxu0 0
      %548 = vmatpush1.bf16.msra.mxu0 %v525
      %549 = vmatprep.subr.bf16.mxu0 0
      %550 = vmatpush1.bf16.msra.mxu0 %v526
      %551 = vmatprep.subr.bf16.mxu0 0
      %552 = vmatpush1.bf16.msra.mxu0 0
      %553 = vmatprep.subr.bf16.mxu0 0
      %554 = vmatpush1.bf16.msra.mxu0 0
      %555 = vmatprep.subr.bf16.mxu0 0
      %556 = vmatpush1.bf16.msra.mxu0 0
      %557 = vmatprep.subr.bf16.mxu0 0
      %558 = vmatpush1.bf16.msra.mxu0 0
      %559 = vmatprep.subr.bf16.mxu0 0
      %560 = vmatpush1.bf16.msra.mxu0 0
      %561 = vmatprep.subr.bf16.mxu0 0
      %562 = vmatpush1.bf16.msra.mxu0 0
      %563 = vmatprep.subr.bf16.mxu0 0
      %564 = vmatpush1.bf16.msra.mxu0 0
      %565 = vmatprep.subr.bf16.mxu0 0
      %566 = vmatpush1.bf16.msra.mxu0 0
      %567 = vmatprep.mubr.bf16.mxu0 0
      %568 = vmatmul.mubr.bf16.gmra.mrb[0].mxu0 %v479
      %v569 = vpop.f32.mrb[0].mxu0
      %v570 = vadd.f32 %v485, %v569
      %v571 = vpop.f32.mrb[0].mxu0
      %v572 = vpop.f32.mrb[0].mxu0
      %v573 = vadd.f32 %v485, %v572
      %v574 = vpop.f32.mrb[0].mxu0
      %575 = vmatprep.mubr.bf16.mxu0 0
      %576 = vmatmul.mubr.bf16.gmra.mrb[0].mxu0 %v480
      %v577 = vpop.f32.mrb[0].mxu0
      %v578 = vadd.f32 %v485, %v577
      %v579 = vpop.f32.mrb[0].mxu0
      %v580 = vpop.f32.mrb[0].mxu0
      %v581 = vadd.f32 %v485, %v580
      %v582 = vpop.f32.mrb[0].mxu0
      %583 = vdwg.mxu0
      %v584 = vmax.f32 %v570, 0.0
      %v585 = vmax.f32 %v573, 0.0
      %v586 = vmax.f32 %v578, 0.0
      %v587 = vmax.f32 %v581, 0.0
      %v588 = vpack.c.bf16 %v585, %v584
      %v589 = vpack.c.bf16 %v587, %v586
      %v591 = vlaneseq
      %v592 = vshrl.u32 %v591, 7
      %v593 = vsub.s32 0, %v592
      %v594 = vrot.slane %v329, %v593
      %v604 = vunpack.c.l.b16 %v321
      %v605 = vunpack.c.l.b16 %v322
      %v606 = vunpack.c.l.b16 %v323
      %v607 = vunpack.c.l.b16 %v324
      %v608 = vunpack.c.l.b16 %v325
      %v609 = vunpack.c.l.b16 %v326
      %v610 = vunpack.c.l.b16 %v327
      %v611 = vunpack.c.l.b16 %v328
      %v612 = vpack.c.b16 %v605, %v604
      %v613 = vpack.c.b16 %v607, %v606
      %v614 = vpack.c.b16 %v609, %v608
      %v615 = vpack.c.b16 %v611, %v610
      %vm620 = vcmask 523264
      %v622 = vsel %vm620, %v588, 0
      %v625 = vsel %vm620, %v589, 0
      %627 = vmatprep.subr.bf16.mxu0 0
      %628 = vmatpush1.bf16.msra.mxu0 %v612
      %629 = vmatprep.subr.bf16.mxu0 0
      %630 = vmatpush1.bf16.msra.mxu0 %v613
      %631 = vmatprep.subr.bf16.mxu0 0
      %632 = vmatpush1.bf16.msra.mxu0 %v614
      %633 = vmatprep.subr.bf16.mxu0 0
      %634 = vmatpush1.bf16.msra.mxu0 %v615
      %635 = vmatprep.subr.bf16.mxu0 0
      %636 = vmatpush1.bf16.msra.mxu0 0
      %637 = vmatprep.subr.bf16.mxu0 0
      %638 = vmatpush1.bf16.msra.mxu0 0
      %639 = vmatprep.subr.bf16.mxu0 0
      %640 = vmatpush1.bf16.msra.mxu0 0
      %641 = vmatprep.subr.bf16.mxu0 0
      %642 = vmatpush1.bf16.msra.mxu0 0
      %643 = vmatprep.subr.bf16.mxu0 0
      %644 = vmatpush1.bf16.msra.mxu0 0
      %645 = vmatprep.subr.bf16.mxu0 0
      %646 = vmatpush1.bf16.msra.mxu0 0
      %647 = vmatprep.subr.bf16.mxu0 0
      %648 = vmatpush1.bf16.msra.mxu0 0
      %649 = vmatprep.subr.bf16.mxu0 0
      %650 = vmatpush1.bf16.msra.mxu0 0
      %651 = vmatprep.subr.bf16.mxu0 0
      %652 = vmatpush1.bf16.msra.mxu0 0
      %653 = vmatprep.subr.bf16.mxu0 0
      %654 = vmatpush1.bf16.msra.mxu0 0
      %655 = vmatprep.subr.bf16.mxu0 0
      %656 = vmatpush1.bf16.msra.mxu0 0
      %657 = vmatprep.subr.bf16.mxu0 0
      %658 = vmatpush1.bf16.msra.mxu0 0
      %659 = vmatprep.mubr.bf16.mxu0 0
      %660 = vmatmul.mubr.bf16.gmra.mrb[0].mxu0 %v622
      %v661 = vpop.f32.mrb[0].mxu0
      %v662 = vadd.f32 %v594, %v661
      %v663 = vpop.f32.mrb[0].mxu0
      %v664 = vpop.f32.mrb[0].mxu0
      %v665 = vadd.f32 %v594, %v664
      %v666 = vpop.f32.mrb[0].mxu0
      %667 = vmatprep.mubr.bf16.mxu0 0
      %668 = vmatmul.mubr.bf16.gmra.mrb[0].mxu0 %v625
      %v669 = vpop.f32.mrb[0].mxu0
      %v670 = vadd.f32 %v594, %v669
      %v671 = vpop.f32.mrb[0].mxu0
      %v672 = vpop.f32.mrb[0].mxu0
      %v673 = vadd.f32 %v594, %v672
      %v674 = vpop.f32.mrb[0].mxu0
      %675 = vdwg.mxu0
      %vm676 = vcmask 15360
      %677 = vst.msk [vmem:[%s283] sm:$0xff] %vm676, %v662
      %678 = vst.msk [vmem:[%s283 + $0x8] sm:$0xff] %vm676, %v665
      %679 = vst.msk [vmem:[%s283 + $0x10] sm:$0xff] %vm676, %v670
      %680 = vst.msk [vmem:[%s283 + $0x18] sm:$0xff] %vm676, %v673
      %s681 = smul.u32 4, %s18
      %p682 = scmp.lt.s32.totalorder %s681, 7
      %s683 = scalar_select %p682, %s681, 7
      %s684 = smul.addr %s683, 8
      %s685 = scalar_lea.vmem %s7, %s684
      // Predicated region
      $region49: #{tpu_custom_call.1} parent=47 // pred_check
        %p686 = pneg %p188
      $region50: #{tpu_custom_call.1} parent=47 // pred_check_branch
        %688 = sbr.rel (%p686) target = $region52
      $region51: #{tpu_custom_call.1} parent=47 // pred_region
        %s689 = smul.u32 4, %s18
      $region52: #{tpu_custom_call.1} parent=47 // pred_fallthru
        _
    $region48: #{tpu_custom_call.1} parent=5 // pred_fallthru
      _
    %p690 = scmp.le.s32.totalorder 2, %s13
    // Predicated region
    $region53: #{tpu_custom_call.1} parent=5 // pred_check
      %p691 = pneg %p690
    $region54: #{tpu_custom_call.1} parent=5 // pred_check_branch
      %693 = sbr.rel (%p691) target = $region56
    $region55: #{tpu_custom_call.1} parent=5 // pred_region
      %s694 = ssub.s32 %s13, 2
      // Predicated region
      $region57: #{tpu_custom_call.1} parent=55 // pred_check
        %p695 = pneg %p194
      $region58: #{tpu_custom_call.1} parent=55 // pred_check_branch
        %697 = sbr.rel (%p695) target = $region60
      $region59: #{tpu_custom_call.1} parent=55 // pred_region
        %s698 = smul.u32 4, %s19
        %p699 = scmp.lt.s32.totalorder %s698, 7
        %s700 = scalar_select %p699, %s698, 7
        %s701 = smul.addr %s700, 8
        %s702 = scalar_lea.vmem %s7, %s701
      $region60: #{tpu_custom_call.1} parent=55 // pred_fallthru
        _
    $region56: #{tpu_custom_call.1} parent=5 // pred_fallthru
      _
  $region6: #{tpu_custom_call.1} parent=0 // loop_footer
    %s17 = sadd.s32 1, %s13
  $region7: #{tpu_custom_call.1} parent=0 // loop_footer_branch
    %12 = sbr.rel target = $region3
  $region8: #{tpu_custom_call.1} parent=0 // loop_exit
    _

</llo_original>
